<compile_context>
chip_gen: v7x
topology: tpu7x:2x2x1
jax: 0.10.0
libtpu: 0.0.40
codegen_flags: <defaults>
</compile_context>

<pallas_src>
import jax
import jax.numpy as jnp
from jax.experimental import pallas as pl
from jax.experimental.pallas import tpu as pltpu


def se_attention_kernel(x_ref, w1_ref, w2_ref, o_ref):
    # x_ref: (1, C, HW)   w1_ref: (C, Cr)   w2_ref: (Cr, C)   o_ref: (1, C, HW)
    hw = x_ref.shape[-1]
    inv_hw = 1.0 / hw  # Python constant; folds into the squeeze.

    # --- Squeeze: spatial mean over the lane (HW) axis, accumulated in f32.
    y = jnp.sum(x_ref[...].astype(jnp.float32), axis=-1) * inv_hw        # (1, C)

    # --- Excitation: Linear -> ReLU -> Linear -> Sigmoid (tiny MXU work).
    h = jnp.maximum(
        jnp.dot(y, w1_ref[...].astype(jnp.float32),
                preferred_element_type=jnp.float32), 0.0)                # (1, Cr)
    s = jax.nn.sigmoid(
        jnp.dot(h, w2_ref[...].astype(jnp.float32),
                preferred_element_type=jnp.float32))                     # (1, C)

    # --- Scale: per-channel gate broadcast across the spatial (lane) axis.
    gate = s[:, :, None].astype(x_ref.dtype)                             # (1, C, 1)
    o_ref[...] = (x_ref[...] * gate).astype(o_ref.dtype)


def se_attention(x_nchw, w1, w2):
    """x_nchw: (B, C, H, W); w1: (C, C//r) = fc0.weight.T; w2: (C//r, C) = fc2.weight.T."""
    B, C, H, W = x_nchw.shape
    HW = H * W
    Cr = w1.shape[1]
    x_flat = x_nchw.reshape(B, C, HW)

    # VMEM budget: pipeline holds ~2 input + 2 output per-batch tiles plus the
    # resident weights. Only raise the scoped limit when the default won't fit.
    block_bytes = C * HW * x_flat.dtype.itemsize
    weight_bytes = (C * Cr + Cr * C) * jnp.dtype(w1.dtype).itemsize
    needed = 4 * block_bytes + 2 * weight_bytes + (1 << 20)
    compiler_kwargs = dict(dimension_semantics=("parallel",))
    if needed > (32 << 20):
        compiler_kwargs["vmem_limit_bytes"] = min(needed, 60 << 20)

    out_flat = pl.pallas_call(
        se_attention_kernel,
        out_shape=jax.ShapeDtypeStruct((B, C, HW), x_flat.dtype),
        grid_spec=pltpu.PrefetchScalarGridSpec(
            num_scalar_prefetch=0,
            grid=(B,),
            in_specs=[
                # One batch element per step; C and HW stay full-extent.
                pl.BlockSpec((1, C, HW), lambda b: (b, 0, 0)),
                # Constant index_maps: weights stay resident in VMEM.
                pl.BlockSpec((C, Cr), lambda b: (0, 0)),
                pl.BlockSpec((Cr, C), lambda b: (0, 0)),
            ],
            out_specs=pl.BlockSpec((1, C, HW), lambda b: (b, 0, 0)),
        ),
        compiler_params=pltpu.CompilerParams(**compiler_kwargs),
    )(x_flat, w1, w2)

    return out_flat.reshape(B, C, H, W)


def _reference(x, w1, w2):
    # Pure-JAX reference mirroring the PyTorch module.
    y = jnp.mean(x.astype(jnp.float32), axis=(2, 3))
    h = jnp.maximum(y @ w1.astype(jnp.float32), 0.0)
    s = jax.nn.sigmoid(h @ w2.astype(jnp.float32))
    return (x * s[:, :, None, None].astype(x.dtype)).astype(x.dtype)


if __name__ == "__main__":
    # Small shapes consistent with SEAttention(channel=C, reduction=16).
    B, C, H, W = 2, 64, 16, 16
    reduction = 16
    Cr = C // reduction  # 4

    key = jax.random.PRNGKey(0)
    kx, k1, k2 = jax.random.split(key, 3)

    x = jax.random.normal(kx, (B, C, H, W), dtype=jnp.float32)
    # nn.Linear weight shapes (init.normal_(std=0.001) in init_weights):
    #   fc[0].weight: (C//r, C) -> stored transposed as w1: (C, C//r)
    #   fc[2].weight: (C, C//r) -> stored transposed as w2: (C//r, C)
    w1 = 0.001 * jax.random.normal(k1, (C, Cr), dtype=jnp.float32)
    w2 = 0.001 * jax.random.normal(k2, (Cr, C), dtype=jnp.float32)

    out = se_attention(x, w1, w2)
    jax.block_until_ready(out)

    ref = _reference(x, w1, w2)
    assert out.shape == (B, C, H, W)
    assert jnp.allclose(out, ref, atol=1e-5, rtol=1e-5), "mismatch vs reference"

    print("KERNEL_OK")
</pallas_src>

<mosaic_0001>
module attributes {stable_mosaic.version = 11 : i64} {
  func.func @se_attention_kernel(%arg0: i32, %arg1: memref<1x64x256xf32, #tpu.memory_space<vmem>>, %arg2: memref<64x4xf32, #tpu.memory_space<vmem>>, %arg3: memref<4x64xf32, #tpu.memory_space<vmem>>, %arg4: memref<1x64x256xf32, #tpu.memory_space<vmem>>) attributes {dimension_semantics = [#tpu.dimension_semantics<parallel>], iteration_bounds = array<i64: 2>, scalar_prefetch = 0 : i64, scratch_operands = 0 : i64, tpu.core_type = #tpu.core_type<tc>, window_params = [{transform_indices = @transform_0, window_bounds = array<i64: 1, 64, 256>}, {pipeline_mode = #tpu.pipeline_mode<synchronous>, transform_indices = @transform_1, window_bounds = array<i64: 64, 4>}, {pipeline_mode = #tpu.pipeline_mode<synchronous>, transform_indices = @transform_2, window_bounds = array<i64: 4, 64>}, {transform_indices = @transform_3, window_bounds = array<i64: 1, 64, 256>}]} {
    %c0 = arith.constant 0 : index
    %c0_0 = arith.constant 0 : index
    %c0_1 = arith.constant 0 : index
    %0 = vector.load %arg1[%c0, %c0_0, %c0_1] : memref<1x64x256xf32, #tpu.memory_space<vmem>>, vector<1x64x256xf32>
    %cst = arith.constant dense<0.000000e+00> : vector<1x64xf32>
    %1 = vector.multi_reduction <add>, %0, %cst [2] : vector<1x64x256xf32> to vector<1x64xf32>
    %cst_2 = arith.constant 3.906250e-03 : f32
    %2 = vector.broadcast %cst_2 : f32 to vector<1x64xf32>
    %3 = arith.mulf %1, %2 : vector<1x64xf32>
    %c0_3 = arith.constant 0 : index
    %c0_4 = arith.constant 0 : index
    %4 = vector.load %arg2[%c0_3, %c0_4] : memref<64x4xf32, #tpu.memory_space<vmem>>, vector<64x4xf32>
    %cst_5 = arith.constant dense<0.000000e+00> : vector<1x4xf32>
    %5 = tpu.matmul %3, %4, %cst_5 {dimension_numbers = #tpu.dot_dimension_numbers<[1], [0], [0], [1], [0, 0, 1, 1], [], []>} : vector<1x64xf32>, vector<64x4xf32>, vector<1x4xf32> -> vector<1x4xf32>
    %cst_6 = arith.constant 0.000000e+00 : f32
    %6 = vector.broadcast %cst_6 : f32 to vector<1x4xf32>
    %7 = arith.maximumf %5, %6 : vector<1x4xf32>
    %c0_7 = arith.constant 0 : index
    %c0_8 = arith.constant 0 : index
    %8 = vector.load %arg3[%c0_7, %c0_8] : memref<4x64xf32, #tpu.memory_space<vmem>>, vector<4x64xf32>
    %cst_9 = arith.constant dense<0.000000e+00> : vector<1x64xf32>
    %9 = tpu.matmul %7, %8, %cst_9 {dimension_numbers = #tpu.dot_dimension_numbers<[1], [0], [0], [1], [0, 0, 1, 1], [], []>} : vector<1x4xf32>, vector<4x64xf32>, vector<1x64xf32> -> vector<1x64xf32>
    %10 = arith.negf %9 : vector<1x64xf32>
    %11 = math.exp %10 : vector<1x64xf32>
    %cst_10 = arith.constant 1.000000e+00 : f32
    %12 = vector.broadcast %cst_10 : f32 to vector<1x64xf32>
    %13 = arith.addf %12, %11 : vector<1x64xf32>
    %14 = arith.divf %12, %13 : vector<1x64xf32>
    %15 = vector.shape_cast %14 : vector<1x64xf32> to vector<1x64x1xf32>
    %c0_11 = arith.constant 0 : index
    %c0_12 = arith.constant 0 : index
    %c0_13 = arith.constant 0 : index
    %16 = vector.load %arg1[%c0_11, %c0_12, %c0_13] : memref<1x64x256xf32, #tpu.memory_space<vmem>>, vector<1x64x256xf32>
    %17 = vector.broadcast %15 : vector<1x64x1xf32> to vector<1x64x256xf32>
    %18 = arith.mulf %16, %17 : vector<1x64x256xf32>
    %c0_14 = arith.constant 0 : index
    %c0_15 = arith.constant 0 : index
    %c0_16 = arith.constant 0 : index
    %19 = vector.load %arg4[%c0_14, %c0_15, %c0_16] : memref<1x64x256xf32, #tpu.memory_space<vmem>>, vector<1x64x256xf32>
    tpu.vector_store %arg4[%c0_14, %c0_15, %c0_16], %18 {strides = array<i32>} : memref<1x64x256xf32, #tpu.memory_space<vmem>>, vector<1x64x256xf32>,
    return
  }
  func.func @transform_0(%arg0: i32) -> (i32, i32, i32) {
    %c0_i32 = arith.constant 0 : i32
    %c0_i32_0 = arith.constant 0 : i32
    %c0_i32_1 = arith.constant 0 : i32
    return %arg0, %c0_i32, %c0_i32_0 : i32, i32, i32
  }
  func.func @transform_1(%arg0: i32) -> (i32, i32) {
    %c0_i32 = arith.constant 0 : i32
    %c0_i32_0 = arith.constant 0 : i32
    %c0_i32_1 = arith.constant 0 : i32
    return %c0_i32, %c0_i32_0 : i32, i32
  }
  func.func @transform_2(%arg0: i32) -> (i32, i32) {
    %c0_i32 = arith.constant 0 : i32
    %c0_i32_0 = arith.constant 0 : i32
    %c0_i32_1 = arith.constant 0 : i32
    return %c0_i32, %c0_i32_0 : i32, i32
  }
  func.func @transform_3(%arg0: i32) -> (i32, i32, i32) {
    %c0_i32 = arith.constant 0 : i32
    %c0_i32_0 = arith.constant 0 : i32
    %c0_i32_1 = arith.constant 0 : i32
    return %arg0, %c0_i32, %c0_i32_0 : i32, i32, i32
  }
}

</mosaic_0001>

<llo_original>
// kernel: tpu_custom_call.1
$region0: #{tpu_custom_call.1}
  #allocation0 [shape = 'u32[]', space=smem, size = 0x4, offset = 0x4, fixed_abs, tag = 'smem constant byte address 0x4 - core index']
  #allocation1 [shape = 'u32[144,128]{1,0:T(1,128)}', space=vmem, size = 0x12000, scoped, tag = 'internal scratch']
  %s0 = inlined_call_operand.hbm [shape: f32[2,64,256], index: 0, kind: input, shape index: {}]
  %s1 = inlined_call_operand.vmem [shape: f32[64,4], index: 1, kind: input, shape index: {}]
  %s2 = inlined_call_operand.vmem [shape: f32[4,64], index: 2, kind: input, shape index: {}]
  %s3 = inlined_call_operand.hbm [shape: f32[2,64,256], index: 3, kind: output, shape index: {}]
  %s4 = sld [smem:[#allocation0]]
  $region49: #{tpu_custom_call.1} parent=0
    _
  %s6 = ssub.s32 1, %s4
  %s7 = scalar_select 0, %s6, %s4
  $region1: #{tpu_custom_call.1} parent=0
    #allocation2 [shape = 'u8[131072]{0}', space=vmem, size = 0x20000, scoped, tag = 'input window, operand 0']
    #allocation3 [shape = 's32[2]{0}', space=sflag, size = 0x8, scoped, tag = 'scoped memory for tpu_custom_call.1']
    #allocation4 [shape = 's32[2]{0}', space=sflag, size = 0x8, scoped, tag = 'scoped memory for tpu_custom_call.1']
    #allocation5 [shape = 'u8[131072]{0}', space=vmem, size = 0x20000, scoped, tag = 'output window, operand 0']
    %8 = vsyncpa [#allocation3], 0
    %s9 = scalar_lea.sflag [#allocation3], 1
    %10 = vsyncpa %s9, 0
    %11 = vsyncpa [#allocation4], 0
    %s12 = scalar_lea.sflag [#allocation4], 1
    %13 = vsyncpa %s12, 0
    loop: start=0, step=1, limit=4
    $region2: #{tpu_custom_call.1} parent=1 // loop_pre_header
      _
    $region3: #{tpu_custom_call.1} parent=1 // loop_header
      %s15 = sphi 0, %s19
      %p16 = scmp.ge.s32.totalorder %s15, 4
      %s25 = sphi 0, %s27
      %s28 = sphi 0, %s25
      %s29 = sphi 0, %s28
      %s45 = sphi 0, %s29
      %s49 = sphi 0, %s49
      %s51 = sphi 0, %s49
      %s52 = sphi 0, %s51
      %s66 = sphi 0, %s52
      %s70 = sphi 0, %s70
      %s72 = sphi 0, %s70
      %s73 = sphi 0, %s72
      %s87 = sphi 0, %s73
      %s93 = sphi 0, %s95
      %s96 = sphi 0, %s93
      %s97 = sphi 0, %s96
      %s113 = sphi 0, %s97
    $region4: #{tpu_custom_call.1} parent=1 // loop_header_branch
      %18 = sbr.rel (%p16) target = $region8
    $region5: #{tpu_custom_call.1} parent=1 // loop_body
      %s20 = ssub.s32 %s15, 1
      %s21 = ssub.s32 %s15, 2
      %s22 = sadd.s32 %s15, 1
      %s23 = ssub.s32 %s15, %s22
      %p24 = scmp.eq.s32.totalorder %s23, 0
      %s26 = sadd.s32 %s25, 1
      %s27 = scalar_select %p24, %s25, %s26
      %p30 = pneg %p24
      %p31 = scmp.eq.s32.totalorder %s15, 1
      %p32 = por %p30, %p31
      %p33 = scmp.ne.s32.totalorder %s25, %s28
      %p34 = scmp.eq.s32.totalorder %s15, 0
      %p35 = por %p33, %p34
      %p36 = scmp.ne.s32.totalorder %s25, %s28
      %p37 = scmp.eq.s32.totalorder %s20, 1
      %p38 = por %p36, %p37
      %p39 = scmp.ne.s32.totalorder %s28, %s29
      %p40 = scmp.eq.s32.totalorder %s20, 0
      %p41 = por %p39, %p40
      %p42 = scmp.ne.s32.totalorder %s28, %s29
      %p43 = scmp.eq.s32.totalorder %s21, 1
      %p44 = por %p42, %p43
      %p46 = scmp.ne.s32.totalorder %s29, %s45
      %p47 = scmp.eq.s32.totalorder %s21, 0
      %p48 = por %p46, %p47
      %s50 = sadd.s32 %s49, 1
      %p53 = scmp.eq.s32.totalorder %s15, 1
      %p54 = scmp.ne.s32.totalorder %s49, %s51
      %p55 = scmp.eq.s32.totalorder %s15, 0
      %p56 = por %p54, %p55
      %p57 = scmp.ne.s32.totalorder %s49, %s51
      %p58 = scmp.eq.s32.totalorder %s20, 1
      %p59 = por %p57, %p58
      %p60 = scmp.ne.s32.totalorder %s51, %s52
      %p61 = scmp.eq.s32.totalorder %s20, 0
      %p62 = por %p60, %p61
      %p63 = scmp.ne.s32.totalorder %s51, %s52
      %p64 = scmp.eq.s32.totalorder %s21, 1
      %p65 = por %p63, %p64
      %p67 = scmp.ne.s32.totalorder %s52, %s66
      %p68 = scmp.eq.s32.totalorder %s21, 0
      %p69 = por %p67, %p68
      %s71 = sadd.s32 %s70, 1
      %p74 = scmp.eq.s32.totalorder %s15, 1
      %p75 = scmp.ne.s32.totalorder %s70, %s72
      %p76 = scmp.eq.s32.totalorder %s15, 0
      %p77 = por %p75, %p76
      %p78 = scmp.ne.s32.totalorder %s70, %s72
      %p79 = scmp.eq.s32.totalorder %s20, 1
      %p80 = por %p78, %p79
      %p81 = scmp.ne.s32.totalorder %s72, %s73
      %p82 = scmp.eq.s32.totalorder %s20, 0
      %p83 = por %p81, %p82
      %p84 = scmp.ne.s32.totalorder %s72, %s73
      %p85 = scmp.eq.s32.totalorder %s21, 1
      %p86 = por %p84, %p85
      %p88 = scmp.ne.s32.totalorder %s73, %s87
      %p89 = scmp.eq.s32.totalorder %s21, 0
      %p90 = por %p88, %p89
      %s91 = ssub.s32 %s15, %s22
      %p92 = scmp.eq.s32.totalorder %s91, 0
      %s94 = sadd.s32 %s93, 1
      %s95 = scalar_select %p92, %s93, %s94
      %p98 = pneg %p92
      %p99 = scmp.eq.s32.totalorder %s15, 1
      %p100 = por %p98, %p99
      %p101 = scmp.ne.s32.totalorder %s93, %s96
      %p102 = scmp.eq.s32.totalorder %s15, 0
      %p103 = por %p101, %p102
      %p104 = scmp.ne.s32.totalorder %s93, %s96
      %p105 = scmp.eq.s32.totalorder %s20, 1
      %p106 = por %p104, %p105
      %p107 = scmp.ne.s32.totalorder %s96, %s97
      %p108 = scmp.eq.s32.totalorder %s20, 0
      %p109 = por %p107, %p108
      %p110 = scmp.ne.s32.totalorder %s96, %s97
      %p111 = scmp.eq.s32.totalorder %s21, 1
      %p112 = por %p110, %p111
      %p114 = scmp.ne.s32.totalorder %s97, %s113
      %p115 = scmp.eq.s32.totalorder %s21, 0
      %p116 = por %p114, %p115
      %p117 = scmp.le.s32.totalorder 1, %s15
      %p118 = scmp.lt.s32.totalorder %s15, 3
      %p119 = pnand %p117, %p118
      %p120 = pneg %p119
      // Predicated region
      $region9: #{tpu_custom_call.1} parent=5 // pred_check
        _
      $region10: #{tpu_custom_call.1} parent=5 // pred_check_branch
        %122 = sbr.rel (%p119) target = $region12
      $region11: #{tpu_custom_call.1} parent=5 // pred_region
        %s123 = ssub.s32 %s15, 1
        // Predicated region
        $region13: #{tpu_custom_call.1} parent=11 // pred_check
          %p124 = pneg %p62
        $region14: #{tpu_custom_call.1} parent=11 // pred_check_branch
          %126 = sbr.rel (%p124) target = $region16
        $region15: #{tpu_custom_call.1} parent=11 // pred_region
          _
        $region16: #{tpu_custom_call.1} parent=11 // pred_fallthru
          _
        // Predicated region
        $region17: #{tpu_custom_call.1} parent=11 // pred_check
          %p127 = pneg %p83
        $region18: #{tpu_custom_call.1} parent=11 // pred_check_branch
          %129 = sbr.rel (%p127) target = $region20
        $region19: #{tpu_custom_call.1} parent=11 // pred_region
          _
        $region20: #{tpu_custom_call.1} parent=11 // pred_fallthru
          _
      $region12: #{tpu_custom_call.1} parent=5 // pred_fallthru
        _
      %p130 = scmp.lt.s32.totalorder %s15, 2
      // Predicated region
      $region21: #{tpu_custom_call.1} parent=5 // pred_check
        %p131 = pneg %p130
      $region22: #{tpu_custom_call.1} parent=5 // pred_check_branch
        %133 = sbr.rel (%p131) target = $region24
      $region23: #{tpu_custom_call.1} parent=5 // pred_region
        // Predicated region
        $region25: #{tpu_custom_call.1} parent=23 // pred_check
          %p134 = pneg %p35
        $region26: #{tpu_custom_call.1} parent=23 // pred_check_branch
          %136 = sbr.rel (%p134) target = $region28
        $region27: #{tpu_custom_call.1} parent=23 // pred_region
          %s137 = sand.u32 %s25, 1
          %s138 = scalar_lea.sflag [#allocation3], %s137
          %s139 = sand.u32 %s25, 1
          %s140 = smul.addr %s139, 128
          %s141 = scalar_lea.vmem [#allocation2], %s140
          %s143 = ssub.s32 2048, 2048
          %144 = vsyncadd %s138, %s143
          %s145 = smul.addr %s15, 16
          %s146 = smul.addr %s145, 128
          %s147 = scalar_lea.hbm %s0, %s146
          %s148 = sshll.u32 %s141, 4
          %s149 = int_to_ptr.vmem [resolvable:$true] %s148
          %154 = dma.hbm_to_vmem [thread:$0]  %s147, 2048, %s149, %s138, 256, 256, 16
        $region28: #{tpu_custom_call.1} parent=23 // pred_fallthru
          _
      $region24: #{tpu_custom_call.1} parent=5 // pred_fallthru
        _
      %p155 = scmp.le.s32.totalorder 1, %s15
      %p156 = scmp.lt.s32.totalorder %s15, 3
      %p157 = pnand %p155, %p156
      %p158 = pneg %p157
      // Predicated region
      $region29: #{tpu_custom_call.1} parent=5 // pred_check
        _
      $region30: #{tpu_custom_call.1} parent=5 // pred_check_branch
        %160 = sbr.rel (%p157) target = $region32
      $region31: #{tpu_custom_call.1} parent=5 // pred_region
        %s161 = ssub.s32 %s15, 1
        %s162 = sand.u32 %s28, 1
        %s163 = scalar_lea.sflag [#allocation3], %s162
        %s164 = sand.u32 %s28, 1
        %s165 = smul.addr %s164, 128
        %s166 = scalar_lea.vmem [#allocation2], %s165
        // Predicated region
        $region33: #{tpu_custom_call.1} parent=31 // pred_check
          %p167 = pneg %p41
        $region34: #{tpu_custom_call.1} parent=31 // pred_check_branch
          %169 = sbr.rel (%p167) target = $region36
        $region35: #{tpu_custom_call.1} parent=31 // pred_region
          %170 = dma.done %s163, 2048
        $region36: #{tpu_custom_call.1} parent=31 // pred_fallthru
          _
        %s171 = sand.u32 %s28, 1
        %s172 = scalar_lea.sflag [#allocation3], %s171
        %s173 = sand.u32 %s28, 1
        %s174 = smul.addr %s173, 128
        %s175 = scalar_lea.vmem [#allocation2], %s174
        %p176 = pneg %p41
        %p177 = pneg %p38
        %p178 = pneg %p62
        %p179 = pneg %p59
        %p180 = pneg %p83
        %p181 = pneg %p80
        %p182 = pneg %p109
        %p183 = pneg %p106
        %s184 = sand.u32 %s96, 1
        %s185 = scalar_lea.sflag [#allocation4], %s184
        %s186 = sand.u32 %s96, 1
        %s187 = smul.addr %s186, 128
        %s188 = scalar_lea.vmem [#allocation5], %s187
        %v189 = vld [vmem:[%s166] sm:$0xff]
        %v190 = vld [vmem:[%s166 + $0x8] sm:$0xff]
        %v191 = vld [vmem:[%s166 + $0x10] sm:$0xff]
        %v192 = vld [vmem:[%s166 + $0x18] sm:$0xff]
        %v193 = vld [vmem:[%s166 + $0x20] sm:$0xff]
        %v194 = vld [vmem:[%s166 + $0x28] sm:$0xff]
        %v195 = vld [vmem:[%s166 + $0x30] sm:$0xff]
        %v196 = vld [vmem:[%s166 + $0x38] sm:$0xff]
        %v197 = vld [vmem:[%s166 + $0x40] sm:$0xff]
        %v198 = vld [vmem:[%s166 + $0x48] sm:$0xff]
        %v199 = vld [vmem:[%s166 + $0x50] sm:$0xff]
        %v200 = vld [vmem:[%s166 + $0x58] sm:$0xff]
        %v201 = vld [vmem:[%s166 + $0x60] sm:$0xff]
        %v202 = vld [vmem:[%s166 + $0x68] sm:$0xff]
        %v203 = vld [vmem:[%s166 + $0x70] sm:$0xff]
        %v204 = vld [vmem:[%s166 + $0x78] sm:$0xff]
        %v205 = vadd.f32 %v189, %v190
        %206 = vadd.xlane.f32.xlu0 %v205
        %v207 = vpop.xlane.xlu0 %206
        %v208 = vadd.f32 %v191, %v192
        %209 = vadd.xlane.f32.xlu0 %v208
        %v210 = vpop.xlane.xlu0 %209
        %v211 = vadd.f32 %v193, %v194
        %212 = vadd.xlane.f32.xlu0 %v211
        %v213 = vpop.xlane.xlu0 %212
        %v214 = vadd.f32 %v195, %v196
        %215 = vadd.xlane.f32.xlu0 %v214
        %v216 = vpop.xlane.xlu0 %215
        %v217 = vadd.f32 %v197, %v198
        %218 = vadd.xlane.f32.xlu0 %v217
        %v219 = vpop.xlane.xlu0 %218
        %v220 = vadd.f32 %v199, %v200
        %221 = vadd.xlane.f32.xlu0 %v220
        %v222 = vpop.xlane.xlu0 %221
        %v223 = vadd.f32 %v201, %v202
        %224 = vadd.xlane.f32.xlu0 %v223
        %v225 = vpop.xlane.xlu0 %224
        %v226 = vadd.f32 %v203, %v204
        %227 = vadd.xlane.f32.xlu0 %v226
        %v228 = vpop.xlane.xlu0 %227
        %v229 = vmul.f32 %v207, 0.00390625
        %v230 = vmul.f32 %v210, 0.00390625
        %v231 = vmul.f32 %v213, 0.00390625
        %v232 = vmul.f32 %v216, 0.00390625
        %v233 = vmul.f32 %v219, 0.00390625
        %v234 = vmul.f32 %v222, 0.00390625
        %v235 = vmul.f32 %v225, 0.00390625
        %v236 = vmul.f32 %v228, 0.00390625
        %v237 = vld [vmem:[%s1] sm:$0xff]
        %v238 = vld [vmem:[%s1 + $0x8] sm:$0xff]
        %v239 = vld [vmem:[%s1 + $0x10] sm:$0xff]
        %v240 = vld [vmem:[%s1 + $0x18] sm:$0xff]
        %v241 = vld [vmem:[%s1 + $0x20] sm:$0xff]
        %v242 = vld [vmem:[%s1 + $0x28] sm:$0xff]
        %v243 = vld [vmem:[%s1 + $0x30] sm:$0xff]
        %v244 = vld [vmem:[%s1 + $0x38] sm:$0xff]
        %v253 = vlaneseq
        %v254 = vand.u32 %v253, 127
        %v255 = vlaneseq
        %v256 = vshrl.u32 %v255, 7
        %v257 = vsub.s32 %v254, %v256
        %v258 = vrot.slane %v229, %v257
        %v259 = vadd.s32 %v254, 4294967288
        %v260 = vlaneseq
        %v261 = vshrl.u32 %v260, 7
        %v262 = vsub.s32 %v259, %v261
        %v263 = vrot.slane %v230, %v262
        %vm264 = vcmask 130112
        %v265 = vsel %vm264, %v263, %v258
        %v266 = vadd.s32 %v254, 4294967280
        %v267 = vlaneseq
        %v268 = vshrl.u32 %v267, 7
        %v269 = vsub.s32 %v266, %v268
        %v270 = vrot.slane %v231, %v269
        %vm271 = vcmask 195712
        %v272 = vsel %vm271, %v270, %v265
        %v273 = vadd.s32 %v254, 4294967272
        %v274 = vlaneseq
        %v275 = vshrl.u32 %v274, 7
        %v276 = vsub.s32 %v273, %v275
        %v277 = vrot.slane %v232, %v276
        %vm278 = vcmask 261312
        %v279 = vsel %vm278, %v277, %v272
        %v280 = vadd.s32 %v254, 4294967264
        %v281 = vlaneseq
        %v282 = vshrl.u32 %v281, 7
        %v283 = vsub.s32 %v280, %v282
        %v284 = vrot.slane %v233, %v283
        %vm285 = vcmask 326912
        %v286 = vsel %vm285, %v284, %v279
        %v287 = vadd.s32 %v254, 4294967256
        %v288 = vlaneseq
        %v289 = vshrl.u32 %v288, 7
        %v290 = vsub.s32 %v287, %v289
        %v291 = vrot.slane %v234, %v290
        %vm292 = vcmask 392512
        %v293 = vsel %vm292, %v291, %v286
        %v294 = vadd.s32 %v254, 4294967248
        %v295 = vlaneseq
        %v296 = vshrl.u32 %v295, 7
        %v297 = vsub.s32 %v294, %v296
        %v298 = vrot.slane %v235, %v297
        %vm299 = vcmask 458112
        %v300 = vsel %vm299, %v298, %v293
        %v301 = vadd.s32 %v254, 4294967240
        %v302 = vlaneseq
        %v303 = vshrl.u32 %v302, 7
        %v304 = vsub.s32 %v301, %v303
        %v305 = vrot.slane %v236, %v304
        %vm306 = vcmask 523712
        %v307 = vsel %vm306, %v305, %v300
        %vm308 = vcmask 523264
        %v309 = vsel %vm308, %v307, 0
        %311 = vmatprep.subr.mxu0 0.0
        %312 = vmatpush1.msra.mxu0 %v237
        %313 = vmatprep.subr.mxu0 0.0
        %314 = vmatpush1.msra.mxu0 %v238
        %315 = vmatprep.subr.mxu0 0.0
        %316 = vmatpush1.msra.mxu0 %v239
        %317 = vmatprep.subr.mxu0 0.0
        %318 = vmatpush1.msra.mxu0 %v240
        %319 = vmatprep.subr.mxu0 0.0
        %320 = vmatpush1.msra.mxu0 %v241
        %321 = vmatprep.subr.mxu0 0.0
        %322 = vmatpush1.msra.mxu0 %v242
        %323 = vmatprep.subr.mxu0 0.0
        %324 = vmatpush1.msra.mxu0 %v243
        %325 = vmatprep.subr.mxu0 0.0
        %326 = vmatpush1.msra.mxu0 %v244
        %327 = vmatprep.subr.mxu0 0.0
        %328 = vmatpush1.msra.mxu0 0.0
        %329 = vmatprep.subr.mxu0 0.0
        %330 = vmatpush1.msra.mxu0 0.0
        %331 = vmatprep.subr.mxu0 0.0
        %332 = vmatpush1.msra.mxu0 0.0
        %333 = vmatprep.subr.mxu0 0.0
        %334 = vmatpush1.msra.mxu0 0.0
        %335 = vmatprep.subr.mxu0 0.0
        %336 = vmatpush1.msra.mxu0 0.0
        %337 = vmatprep.subr.mxu0 0.0
        %338 = vmatpush1.msra.mxu0 0.0
        %339 = vmatprep.subr.mxu0 0.0
        %340 = vmatpush1.msra.mxu0 0.0
        %341 = vmatprep.subr.mxu0 0.0
        %342 = vmatpush1.msra.mxu0 0.0
        %343 = vmatprep.subr.mxu0 0.0
        %344 = vmatpush1.msra.mxu0 0.0
        %345 = vmatprep.subr.mxu0 0.0
        %346 = vmatpush1.msra.mxu0 0.0
        %347 = vmatprep.subr.mxu0 0.0
        %348 = vmatpush1.msra.mxu0 0.0
        %349 = vmatprep.subr.mxu0 0.0
        %350 = vmatpush1.msra.mxu0 0.0
        %351 = vmatprep.subr.mxu0 0.0
        %352 = vmatpush1.msra.mxu0 0.0
        %353 = vmatprep.subr.mxu0 0.0
        %354 = vmatpush1.msra.mxu0 0.0
        %355 = vmatprep.subr.mxu0 0.0
        %356 = vmatpush1.msra.mxu0 0.0
        %357 = vmatprep.subr.mxu0 0.0
        %358 = vmatpush1.msra.mxu0 0.0
        %359 = vmatprep.subr.mxu0 0.0
        %360 = vmatpush1.msra.mxu0 0.0
        %361 = vmatprep.subr.mxu0 0.0
        %362 = vmatpush1.msra.mxu0 0.0
        %363 = vmatprep.subr.mxu0 0.0
        %364 = vmatpush1.msra.mxu0 0.0
        %365 = vmatprep.subr.mxu0 0.0
        %366 = vmatpush1.msra.mxu0 0.0
        %367 = vmatprep.subr.mxu0 0.0
        %368 = vmatpush1.msra.mxu0 0.0
        %369 = vmatprep.subr.mxu0 0.0
        %370 = vmatpush1.msra.mxu0 0.0
        %371 = vmatprep.subr.mxu0 0.0
        %372 = vmatpush1.msra.mxu0 0.0
        %373 = vmatprep.subr.mxu0 0.0
        %374 = vmatpush1.msra.mxu0 0.0
        %375 = vmatprep.mubr.f32.mxu0 0.0
        %376 = vmatmul.mubr.f32.gmra.mrb[0].mxu0 %v309
        %v377 = vpop.f32.mrb[0].mxu0
        %v378 = vadd.f32 0.0, %v377
        %v379 = vpop.f32.mrb[0].mxu0
        %380 = vdwg.mxu0
        %v381 = vmax.f32 %v378, 0.0
        %v382 = vld [vmem:[%s2] sm:$0xf]
        %vm383 = vcmask 31744
        %v385 = vsel %vm383, %v381, 0
        %vm387 = vcmask 1043456
        %v389 = vsel %vm387, %v382, 0
        %391 = vmatprep.subr.mxu0 0.0
        %392 = vmatpush1.msra.mxu0 %v389
        %393 = vmatprep.subr.mxu0 0.0
        %394 = vmatpush1.msra.mxu0 0.0
        %395 = vmatprep.subr.mxu0 0.0
        %396 = vmatpush1.msra.mxu0 0.0
        %397 = vmatprep.subr.mxu0 0.0
        %398 = vmatpush1.msra.mxu0 0.0
        %399 = vmatprep.subr.mxu0 0.0
        %400 = vmatpush1.msra.mxu0 0.0
        %401 = vmatprep.subr.mxu0 0.0
        %402 = vmatpush1.msra.mxu0 0.0
        %403 = vmatprep.subr.mxu0 0.0
        %404 = vmatpush1.msra.mxu0 0.0
        %405 = vmatprep.subr.mxu0 0.0
        %406 = vmatpush1.msra.mxu0 0.0
        %407 = vmatprep.subr.mxu0 0.0
        %408 = vmatpush1.msra.mxu0 0.0
        %409 = vmatprep.subr.mxu0 0.0
        %410 = vmatpush1.msra.mxu0 0.0
        %411 = vmatprep.subr.mxu0 0.0
        %412 = vmatpush1.msra.mxu0 0.0
        %413 = vmatprep.subr.mxu0 0.0
        %414 = vmatpush1.msra.mxu0 0.0
        %415 = vmatprep.subr.mxu0 0.0
        %416 = vmatpush1.msra.mxu0 0.0
        %417 = vmatprep.subr.mxu0 0.0
        %418 = vmatpush1.msra.mxu0 0.0
        %419 = vmatprep.subr.mxu0 0.0
        %420 = vmatpush1.msra.mxu0 0.0
        %421 = vmatprep.subr.mxu0 0.0
        %422 = vmatpush1.msra.mxu0 0.0
        %423 = vmatprep.subr.mxu0 0.0
        %424 = vmatpush1.msra.mxu0 0.0
        %425 = vmatprep.subr.mxu0 0.0
        %426 = vmatpush1.msra.mxu0 0.0
        %427 = vmatprep.subr.mxu0 0.0
        %428 = vmatpush1.msra.mxu0 0.0
        %429 = vmatprep.subr.mxu0 0.0
        %430 = vmatpush1.msra.mxu0 0.0
        %431 = vmatprep.subr.mxu0 0.0
        %432 = vmatpush1.msra.mxu0 0.0
        %433 = vmatprep.subr.mxu0 0.0
        %434 = vmatpush1.msra.mxu0 0.0
        %435 = vmatprep.subr.mxu0 0.0
        %436 = vmatpush1.msra.mxu0 0.0
        %437 = vmatprep.subr.mxu0 0.0
        %438 = vmatpush1.msra.mxu0 0.0
        %439 = vmatprep.subr.mxu0 0.0
        %440 = vmatpush1.msra.mxu0 0.0
        %441 = vmatprep.subr.mxu0 0.0
        %442 = vmatpush1.msra.mxu0 0.0
        %443 = vmatprep.subr.mxu0 0.0
        %444 = vmatpush1.msra.mxu0 0.0
        %445 = vmatprep.subr.mxu0 0.0
        %446 = vmatpush1.msra.mxu0 0.0
        %447 = vmatprep.subr.mxu0 0.0
        %448 = vmatpush1.msra.mxu0 0.0
        %449 = vmatprep.subr.mxu0 0.0
        %450 = vmatpush1.msra.mxu0 0.0
        %451 = vmatprep.subr.mxu0 0.0
        %452 = vmatpush1.msra.mxu0 0.0
        %453 = vmatprep.subr.mxu0 0.0
        %454 = vmatpush1.msra.mxu0 0.0
        %455 = vmatprep.mubr.f32.mxu0 0.0
        %456 = vmatmul.mubr.f32.gmra.mrb[0].mxu0 %v385
        %v457 = vpop.f32.mrb[0].mxu0
        %v458 = vadd.f32 0.0, %v457
        %v459 = vpop.f32.mrb[0].mxu0
        %460 = vdwg.mxu0
        %v461 = vxor.u32 %v458, 2147483648
        %v462 = vmul.f32 %v461, 1.442695
        %v463 = vpow.pop %v462
        %v464 = vadd.f32 %v463, 1.0
        %v465 = vrcp.pop %v464
        %v466 = vmul.f32 1.0, %v465
        %v467 = vlaneseq
        %v468 = vshrl.u32 %v467, 7
        %v469 = vsub.s32 0, %v468
        %v470 = vrot.slane %v466, %v469
        %472 = vbcast.lane.b32.xlu0 %v470, 256
        %v473 = vpop.permute.xlu0 %472
        %s475 = sor.u32 256, 8
        %476 = vbcast.lane.b32.xlu0 %v470, %s475
        %v477 = vpop.permute.xlu0 %476
        %s479 = sor.u32 256, 16
        %480 = vbcast.lane.b32.xlu0 %v470, %s479
        %v481 = vpop.permute.xlu0 %480
        %s483 = sor.u32 256, 24
        %484 = vbcast.lane.b32.xlu0 %v470, %s483
        %v485 = vpop.permute.xlu0 %484
        %s487 = sor.u32 256, 32
        %488 = vbcast.lane.b32.xlu0 %v470, %s487
        %v489 = vpop.permute.xlu0 %488
        %s491 = sor.u32 256, 40
        %492 = vbcast.lane.b32.xlu0 %v470, %s491
        %v493 = vpop.permute.xlu0 %492
        %s495 = sor.u32 256, 48
        %496 = vbcast.lane.b32.xlu0 %v470, %s495
        %v497 = vpop.permute.xlu0 %496
        %s499 = sor.u32 256, 56
        %500 = vbcast.lane.b32.xlu0 %v470, %s499
        %v501 = vpop.permute.xlu0 %500
        %v502 = vmul.f32 %v189, %v473
        %v503 = vmul.f32 %v190, %v473
        %v504 = vmul.f32 %v191, %v477
        %v505 = vmul.f32 %v192, %v477
        %v506 = vmul.f32 %v193, %v481
        %v507 = vmul.f32 %v194, %v481
        %v508 = vmul.f32 %v195, %v485
        %v509 = vmul.f32 %v196, %v485
        %v510 = vmul.f32 %v197, %v489
        %v511 = vmul.f32 %v198, %v489
        %v512 = vmul.f32 %v199, %v493
        %v513 = vmul.f32 %v200, %v493
        %v514 = vmul.f32 %v201, %v497
        %v515 = vmul.f32 %v202, %v497
        %v516 = vmul.f32 %v203, %v501
        %v517 = vmul.f32 %v204, %v501
        %518 = vst [vmem:[%s188] sm:$0xff] %v502
        %519 = vst [vmem:[%s188 + $0x8] sm:$0xff] %v503
        %520 = vst [vmem:[%s188 + $0x10] sm:$0xff] %v504
        %521 = vst [vmem:[%s188 + $0x18] sm:$0xff] %v505
        %522 = vst [vmem:[%s188 + $0x20] sm:$0xff] %v506
        %523 = vst [vmem:[%s188 + $0x28] sm:$0xff] %v507
        %524 = vst [vmem:[%s188 + $0x30] sm:$0xff] %v508
        %525 = vst [vmem:[%s188 + $0x38] sm:$0xff] %v509
        %526 = vst [vmem:[%s188 + $0x40] sm:$0xff] %v510
        %527 = vst [vmem:[%s188 + $0x48] sm:$0xff] %v511
        %528 = vst [vmem:[%s188 + $0x50] sm:$0xff] %v512
        %529 = vst [vmem:[%s188 + $0x58] sm:$0xff] %v513
        %530 = vst [vmem:[%s188 + $0x60] sm:$0xff] %v514
        %531 = vst [vmem:[%s188 + $0x68] sm:$0xff] %v515
        %532 = vst [vmem:[%s188 + $0x70] sm:$0xff] %v516
        %533 = vst [vmem:[%s188 + $0x78] sm:$0xff] %v517
        %s534 = sand.u32 %s96, 1
        %s535 = scalar_lea.sflag [#allocation4], %s534
        %s536 = sand.u32 %s96, 1
        %s537 = smul.addr %s536, 128
        %s538 = scalar_lea.vmem [#allocation5], %s537
        // Predicated region
        $region37: #{tpu_custom_call.1} parent=31 // pred_check
          %p539 = pneg %p106
        $region38: #{tpu_custom_call.1} parent=31 // pred_check_branch
          %541 = sbr.rel (%p539) target = $region40
        $region39: #{tpu_custom_call.1} parent=31 // pred_region
          %s543 = ssub.s32 2048, 2048
          %544 = vsyncadd %s535, %s543
          %s545 = smul.addr %s20, 16
          %s546 = smul.addr %s545, 128
          %s547 = scalar_lea.hbm %s3, %s546
          %s548 = sshll.u32 %s538, 4
          %s549 = int_to_ptr.vmem [resolvable:$true] %s548
          %554 = dma.vmem_to_hbm [thread:$0]  %s549, 2048, %s547, %s535, 256, 256, 16
        $region40: #{tpu_custom_call.1} parent=31 // pred_fallthru
          _
      $region32: #{tpu_custom_call.1} parent=5 // pred_fallthru
        _
      %p555 = scmp.le.s32.totalorder 2, %s15
      // Predicated region
      $region41: #{tpu_custom_call.1} parent=5 // pred_check
        %p556 = pneg %p555
      $region42: #{tpu_custom_call.1} parent=5 // pred_check_branch
        %558 = sbr.rel (%p556) target = $region44
      $region43: #{tpu_custom_call.1} parent=5 // pred_region
        %s559 = ssub.s32 %s15, 2
        // Predicated region
        $region45: #{tpu_custom_call.1} parent=43 // pred_check
          %p560 = pneg %p112
        $region46: #{tpu_custom_call.1} parent=43 // pred_check_branch
          %562 = sbr.rel (%p560) target = $region48
        $region47: #{tpu_custom_call.1} parent=43 // pred_region
          %s563 = sand.u32 %s97, 1
          %s564 = scalar_lea.sflag [#allocation4], %s563
          %s565 = sand.u32 %s97, 1
          %s566 = smul.addr %s565, 128
          %s567 = scalar_lea.vmem [#allocation5], %s566
          %568 = dma.done %s564, 2048
        $region48: #{tpu_custom_call.1} parent=43 // pred_fallthru
          _
      $region44: #{tpu_custom_call.1} parent=5 // pred_fallthru
        _
    $region6: #{tpu_custom_call.1} parent=1 // loop_footer
      %s19 = sadd.s32 1, %s15
    $region7: #{tpu_custom_call.1} parent=1 // loop_footer_branch
      %14 = sbr.rel target = $region3
    $region8: #{tpu_custom_call.1} parent=1 // loop_exit
      _
    %569 = vsyncpa [#allocation3], 1
    %s570 = scalar_lea.sflag [#allocation3], 1
    %571 = vsyncpa %s570, 1
    %572 = vsyncpa [#allocation4], 1
    %s573 = scalar_lea.sflag [#allocation4], 1
    %574 = vsyncpa %s573, 1

</llo_original>
